<compile_context>
chip_gen: v5e
topology: v5e:2x2
jax: 0.10.0
libtpu: 0.0.40
codegen_flags: <defaults>
</compile_context>

<pallas_src>
import functools

import jax
import jax.numpy as jnp
from jax.experimental import pallas as pl
from jax.experimental.pallas import tpu as pltpu


def _cdiv(a, b):
    return -(-a // b)


def _round_up(a, b):
    return _cdiv(a, b) * b


def _largest_divisor_leq(n, cap):
    cap = max(1, min(n, cap))
    for d in range(cap, 0, -1):
        if n % d == 0:
            return d
    return 1


def _preferred_lane_width():
    """256-lane packing on 256-wide-MXU generations (v6e / v7x), else 128."""
    try:
        kind = jax.devices()[0].device_kind.lower()
    except Exception:
        return 128
    if any(tag in kind for tag in ("v6", "v7", "tpu7")):
        return 256
    return 128


def _to_lane_dense(seg_mean2, bb, tile_r, s):
    """(bb*tile_r, s) -> (bb, s, tile_r) using only 2-D transposes."""
    if bb == 1:
        return seg_mean2.T.reshape(1, s, tile_r)
    # tile_r % 8 == 0 whenever bb > 1, so these reshapes are layout-free.
    sm3 = seg_mean2.reshape(bb, tile_r, s)
    return jnp.stack([sm3[i].T for i in range(bb)], axis=0)


def _mpemd_kernel(x_ref, cdfy_ref, tri_ref, seg_ref, out_ref, *,
                  eps, beta, k, n_patches, n_seg, tile_r, bb,
                  num_r_tiles, has_pad):
    """One (batch-block, row-tile) step: EMD-2 + re-weighting, partial sum."""
    r = pl.program_id(1)
    lanes = x_ref.shape[-1]

    x2 = x_ref[...].reshape(bb * tile_r, lanes)                 # free collapse

    # Segmented cumsum of every packed distribution: one MXU matmul.
    # TODO(synk): on v5e/v7x a bf16 cast of x/tri here is ~3-4x faster on the
    # MXU but adds ~1e-3 abs error; kept f32 to preserve exact f32 numerics.
    cdf_x = jnp.dot(x2, tri_ref[...], preferred_element_type=jnp.float32)

    # cdf(x) - cdf(y): cumsum is linear, so subtract the per-batch target CDF.
    cdf_d = cdf_x.reshape(bb, tile_r, lanes) - cdfy_ref[...]
    sq = (cdf_d * cdf_d).reshape(bb * tile_r, lanes)

    # Per-distribution mean of squared CDF difference (second MXU matmul).
    seg_mean = jnp.dot(sq, seg_ref[...], preferred_element_type=jnp.float32)

    # Lane-dense epilogue: (bb, S, tile_r) so sqrt/pow touch ~16x fewer vregs.
    sm = _to_lane_dense(seg_mean, bb, tile_r, n_seg)
    emd = jnp.sqrt(sm)
    emdc = jnp.maximum(jnp.float32(eps), 1.0 - jnp.float32(k) * emd)
    weight = 1.0 - jnp.power(emdc, jnp.float32(beta))
    contrib = emd * weight

    # Fast path: unmasked partial sum, written exactly once per grid step.
    out_ref[...] = jnp.reshape(jnp.sum(contrib), (1, 1, 1, 1))

    if has_pad:
        # Only the last row tile can contain padded / out-of-range patches.
        @pl.when(r == num_r_tiles - 1)
        def _():
            row = (jax.lax.broadcasted_iota(jnp.int32, (n_seg, tile_r), 1)
                   + r * tile_r)
            seg_j = jax.lax.broadcasted_iota(jnp.int32, (n_seg, tile_r), 0)
            valid = (row * n_seg + seg_j) < n_patches
            masked = jnp.where(valid[None, :, :], contrib, 0.0)
            out_ref[...] = jnp.reshape(jnp.sum(masked), (1, 1, 1, 1))


def mpemd_loss(x, y_true, *, dist_r=2, eps=1e-6, beta=0.7, k=1.2, norm=False,
               lane_width=None, target_block_bytes=4 * 1024 * 1024):
    """Pallas implementation of MPEMDLoss.forward (dist_r=2, norm=False)."""
    assert dist_r == 2, "only dist_r=2 (module default) implemented"
    assert not norm, "norm=True (non-default) not implemented"
    # TODO(synk): dist_r != 2 (L1 EMD) and norm=True per-batch weight
    # normalization are non-default branches and are not implemented.

    B, P, C = x.shape
    assert y_true.shape == (B, C)

    if lane_width is None:
        lane_width = _preferred_lane_width()

    # Packing geometry: pad each C-bin distribution to Cp (power of two) lanes
    # and pack S = lane_width // Cp distributions per L-lane packed row.
    if C <= lane_width:
        Cp = 1
        while Cp < C:
            Cp *= 2
        S = lane_width // Cp
    else:
        # NOTE: C > lane_width keeps one distribution per row; tri is (C, C),
        # i.e. O(C^2) MACs per patch -- intended for moderate C only.
        Cp = C
        S = 1
    L = S * Cp

    itemsize = jnp.dtype(x.dtype).itemsize
    target_rows = max(8, int(target_block_bytes) // (L * itemsize))
    R_raw = _cdiv(P, S)

    if R_raw > target_rows:
        # Large per-batch row count: tile rows (one batch per step).  The last
        # (possibly partial) block is fixed by in-kernel masking, so no row
        # padding of x is needed.
        bb = 1
        num_r_tiles = _cdiv(R_raw, target_rows)
        tile_r = _round_up(_cdiv(R_raw, num_r_tiles), 128)
        num_r_tiles = _cdiv(R_raw, tile_r)
        if num_r_tiles == 1:
            tile_r = R_raw
        R_store = R_raw
    else:
        # Small per-batch row count: block several batches per step so each
        # step still moves a sizeable contiguous chunk; keep >=2-4 grid steps
        # so v7x megacore has work to shard.
        num_r_tiles = 1
        bb_cap = max(1, target_rows // max(R_raw, 1))
        if B >= 4:
            bb_cap = min(bb_cap, max(1, B // 4))
        elif B >= 2:
            bb_cap = min(bb_cap, B // 2)
        bb_cap = min(bb_cap, 32)
        bb = _largest_divisor_leq(B, bb_cap)
        # With bb > 1 the kernel collapses (bb, R, L) -> (bb*R, L); keep the
        # per-batch row count a multiple of 8 so that collapse is layout-free.
        R_store = _round_up(R_raw, 8) if bb > 1 else R_raw
        tile_r = R_store
    nb = B // bb

    # Only the tiny packing remainder (and the 8-row alignment for bb > 1) is
    # padded; row tiling never pads (partial last block + mask instead).
    p_pad = R_store * S - P
    c_pad = Cp - C
    if p_pad or c_pad:
        # TODO(synk): when P % S != 0 this jnp.pad still copies x once in HBM;
        # a fully copy-free variant would handle the <S-patch tail separately.
        x_p = jnp.pad(x, ((0, 0), (0, p_pad), (0, c_pad)))
    else:
        x_p = x
    x_packed = x_p.reshape(B, R_store, L)            # contiguous => free reshape

    # Per-batch target CDF, replicated across the S packed segments.
    y_p = jnp.pad(y_true, ((0, 0), (0, c_pad))) if c_pad else y_true
    cdf_y = jnp.cumsum(y_p.astype(jnp.float32), axis=-1)          # (B, Cp)
    cdf_y_packed = jnp.tile(cdf_y, (1, S)).reshape(B, 1, L)

    # Constant matrices: block-diagonal upper-triangular ones (segmented
    # cumsum) and per-segment mean (zero weight on the Cp-C padded lanes).
    lane = jnp.arange(L)
    seg_of = lane // Cp
    pos = lane % Cp
    tri = ((seg_of[:, None] == seg_of[None, :]) &
           (pos[:, None] <= pos[None, :])).astype(x.dtype)        # (L, L)
    seg = jnp.where((seg_of[:, None] == jnp.arange(S)[None, :]) &
                    (pos[:, None] < C),
                    1.0 / C, 0.0).astype(jnp.float32)             # (L, S)

    has_pad = tile_r * num_r_tiles * S > P

    kernel = functools.partial(
        _mpemd_kernel, eps=eps, beta=beta, k=k, n_patches=P, n_seg=S,
        tile_r=tile_r, bb=bb, num_r_tiles=num_r_tiles, has_pad=has_pad)

    partials = pl.pallas_call(
        kernel,
        out_shape=jax.ShapeDtypeStruct((nb, num_r_tiles, 1, 1), jnp.float32),
        grid_spec=pltpu.PrefetchScalarGridSpec(
            num_scalar_prefetch=0,
            grid=(nb, num_r_tiles),
            in_specs=[
                pl.BlockSpec((bb, tile_r, L), lambda b, r: (b, r, 0)),
                pl.BlockSpec((bb, 1, L), lambda b, r: (b, 0, 0)),
                pl.BlockSpec((L, L), lambda b, r: (0, 0)),
                pl.BlockSpec((L, S), lambda b, r: (0, 0)),
            ],
            out_specs=pl.BlockSpec((1, 1, 1, 1), lambda b, r: (b, r, 0, 0)),
        ),
        compiler_params=pltpu.CompilerParams(
            dimension_semantics=("parallel", "parallel"),
            vmem_limit_bytes=32 * 1024 * 1024),
    )(x_packed, cdf_y_packed, tri, seg)

    return jnp.sum(partials) / jnp.float32(B * P)


def mpemd_loss_ref(x, y_true, *, eps=1e-6, beta=0.7, k=1.2):
    """Plain-JAX reference mirroring the PyTorch module (dist_r=2, norm=False)."""
    B, P, C = x.shape
    x_flat = x.reshape(-1, C)
    y_flat = jnp.repeat(y_true, P, axis=0)
    cdf_x = jnp.cumsum(x_flat, axis=-1)
    cdf_y = jnp.cumsum(y_flat, axis=-1)
    emd = jnp.sqrt(jnp.mean((cdf_y - cdf_x) ** 2, axis=-1))
    loss = emd.reshape(-1, P)
    emdc = jnp.maximum(jnp.full_like(loss, eps), 1.0 - k * loss)
    weight = 1.0 - jnp.power(emdc, beta)
    return jnp.mean(loss * weight)


if __name__ == "__main__":
    key = jax.random.PRNGKey(0)

    def _check(B, P, C, **kw):
        kx, ky = jax.random.split(
            jax.random.fold_in(key, B * 100000 + P * 100 + C))
        # Softmax so inputs look like probability distributions (as EMD expects).
        xv = jax.nn.softmax(jax.random.normal(kx, (B, P, C), jnp.float32), -1)
        yv = jax.nn.softmax(jax.random.normal(ky, (B, C), jnp.float32), -1)
        out = mpemd_loss(xv, yv, **kw)
        jax.block_until_ready(out)
        ref = mpemd_loss_ref(xv, yv)
        assert jnp.allclose(out, ref, atol=1e-5, rtol=1e-5), (B, P, C, out, ref)

    _check(2, 8, 16)                                     # packed, single step
    _check(2, 13, 16)                                    # packing pad + mask
    _check(8, 16, 16)                                    # batch-blocked path (bb > 1)
    _check(2, 12, 10)                                    # C that doesn't divide 128
    _check(2, 2500, 16, target_block_bytes=128 * 1024)   # multi row-tile, partial last block
    print("KERNEL_OK")
</pallas_src>

<mosaic_0001>
module attributes {stable_mosaic.version = 11 : i64} {
  func.func @_mpemd_kernel(%arg0: i32, %arg1: i32, %arg2: memref<1x1x128xf32, #tpu.memory_space<vmem>>, %arg3: memref<1x1x128xf32, #tpu.memory_space<vmem>>, %arg4: memref<128x128xf32, #tpu.memory_space<vmem>>, %arg5: memref<128x8xf32, #tpu.memory_space<vmem>>, %arg6: memref<1x1x1x1xf32, #tpu.memory_space<vmem>>) attributes {dimension_semantics = [#tpu.dimension_semantics<parallel>, #tpu.dimension_semantics<parallel>], iteration_bounds = array<i64: 2, 1>, scalar_prefetch = 0 : i64, scratch_operands = 0 : i64, tpu.core_type = #tpu.core_type<tc>, window_params = [{transform_indices = @transform_0, window_bounds = array<i64: 1, 1, 128>}, {transform_indices = @transform_1, window_bounds = array<i64: 1, 1, 128>}, {pipeline_mode = #tpu.pipeline_mode<synchronous>, transform_indices = @transform_2, window_bounds = array<i64: 128, 128>}, {pipeline_mode = #tpu.pipeline_mode<synchronous>, transform_indices = @transform_3, window_bounds = array<i64: 128, 8>}, {transform_indices = @transform_4, window_bounds = array<i64: 1, 1, 1, 1>}]} {
    %c0 = arith.constant 0 : index
    %c0_0 = arith.constant 0 : index
    %c0_1 = arith.constant 0 : index
    %0 = vector.load %arg2[%c0, %c0_0, %c0_1] : memref<1x1x128xf32, #tpu.memory_space<vmem>>, vector<1x1x128xf32>
    %1 = vector.shape_cast %0 : vector<1x1x128xf32> to vector<1x128xf32>
    %c0_2 = arith.constant 0 : index
    %c0_3 = arith.constant 0 : index
    %2 = vector.load %arg4[%c0_2, %c0_3] : memref<128x128xf32, #tpu.memory_space<vmem>>, vector<128x128xf32>
    %cst = arith.constant dense<0.000000e+00> : vector<1x128xf32>
    %3 = tpu.matmul %1, %2, %cst {dimension_numbers = #tpu.dot_dimension_numbers<[1], [0], [0], [1], [0, 0, 1, 1], [], []>} : vector<1x128xf32>, vector<128x128xf32>, vector<1x128xf32> -> vector<1x128xf32>
    %4 = vector.shape_cast %3 : vector<1x128xf32> to vector<1x1x128xf32>
    %c0_4 = arith.constant 0 : index
    %c0_5 = arith.constant 0 : index
    %c0_6 = arith.constant 0 : index
    %5 = vector.load %arg3[%c0_4, %c0_5, %c0_6] : memref<1x1x128xf32, #tpu.memory_space<vmem>>, vector<1x1x128xf32>
    %6 = arith.subf %4, %5 : vector<1x1x128xf32>
    %7 = arith.mulf %6, %6 : vector<1x1x128xf32>
    %8 = vector.shape_cast %7 : vector<1x1x128xf32> to vector<1x128xf32>
    %c0_7 = arith.constant 0 : index
    %c0_8 = arith.constant 0 : index
    %9 = vector.load %arg5[%c0_7, %c0_8] : memref<128x8xf32, #tpu.memory_space<vmem>>, vector<128x8xf32>
    %cst_9 = arith.constant dense<0.000000e+00> : vector<1x8xf32>
    %10 = tpu.matmul %8, %9, %cst_9 {dimension_numbers = #tpu.dot_dimension_numbers<[1], [0], [0], [1], [0, 0, 1, 1], [], []>} : vector<1x128xf32>, vector<128x8xf32>, vector<1x8xf32> -> vector<1x8xf32>
    %11 = tpu.transpose %10, [1, 0] : vector<1x8xf32> -> vector<8x1xf32>
    %12 = vector.shape_cast %11 : vector<8x1xf32> to vector<1x8x1xf32>
    %13 = math.sqrt %12 : vector<1x8x1xf32>
    %cst_10 = arith.constant 1.200000e+00 : f32
    %14 = vector.broadcast %cst_10 : f32 to vector<1x8x1xf32>
    %15 = arith.mulf %14, %13 : vector<1x8x1xf32>
    %cst_11 = arith.constant 1.000000e+00 : f32
    %16 = vector.broadcast %cst_11 : f32 to vector<1x8x1xf32>
    %17 = arith.subf %16, %15 : vector<1x8x1xf32>
    %cst_12 = arith.constant 9.99999997E-7 : f32
    %18 = vector.broadcast %cst_12 : f32 to vector<1x8x1xf32>
    %19 = arith.maximumf %18, %17 : vector<1x8x1xf32>
    %cst_13 = arith.constant 0.699999988 : f32
    %20 = vector.broadcast %cst_13 : f32 to vector<1x8x1xf32>
    %21 = math.powf %19, %20 : vector<1x8x1xf32>
    %cst_14 = arith.constant 1.000000e+00 : f32
    %22 = vector.broadcast %cst_14 : f32 to vector<1x8x1xf32>
    %23 = arith.subf %22, %21 : vector<1x8x1xf32>
    %24 = arith.mulf %13, %23 : vector<1x8x1xf32>
    %25 = vector.shape_cast %24 : vector<1x8x1xf32> to vector<1x1x8x1xf32>
    %cst_15 = arith.constant dense<0.000000e+00> : vector<1xf32>
    %26 = vector.multi_reduction <add>, %25, %cst_15 [1, 2, 3] : vector<1x1x8x1xf32> to vector<1xf32>
    %27 = vector.shape_cast %26 : vector<1xf32> to vector<1x1x1x1xf32>
    %28 = vector.extract %27[0, 0, 0, 0] : f32 from vector<1x1x1x1xf32>
    %29 = vector.broadcast %28 : f32 to vector<1x1x1x1xf32>
    %c0_16 = arith.constant 0 : index
    %c0_17 = arith.constant 0 : index
    %c0_18 = arith.constant 0 : index
    %c0_19 = arith.constant 0 : index
    %30 = vector.load %arg6[%c0_16, %c0_17, %c0_18, %c0_19] : memref<1x1x1x1xf32, #tpu.memory_space<vmem>>, vector<1x1x1x1xf32>
    tpu.vector_store %arg6[%c0_16, %c0_17, %c0_18, %c0_19], %29 {strides = array<i32>} : memref<1x1x1x1xf32, #tpu.memory_space<vmem>>, vector<1x1x1x1xf32>,
    return
  }
  func.func @transform_0(%arg0: i32, %arg1: i32) -> (i32, i32, i32) {
    %c0_i32 = arith.constant 0 : i32
    %c0_i32_0 = arith.constant 0 : i32
    return %arg0, %arg1, %c0_i32 : i32, i32, i32
  }
  func.func @transform_1(%arg0: i32, %arg1: i32) -> (i32, i32, i32) {
    %c0_i32 = arith.constant 0 : i32
    %c0_i32_0 = arith.constant 0 : i32
    %c0_i32_1 = arith.constant 0 : i32
    return %arg0, %c0_i32, %c0_i32_0 : i32, i32, i32
  }
  func.func @transform_2(%arg0: i32, %arg1: i32) -> (i32, i32) {
    %c0_i32 = arith.constant 0 : i32
    %c0_i32_0 = arith.constant 0 : i32
    %c0_i32_1 = arith.constant 0 : i32
    return %c0_i32, %c0_i32_0 : i32, i32
  }
  func.func @transform_3(%arg0: i32, %arg1: i32) -> (i32, i32) {
    %c0_i32 = arith.constant 0 : i32
    %c0_i32_0 = arith.constant 0 : i32
    %c0_i32_1 = arith.constant 0 : i32
    return %c0_i32, %c0_i32_0 : i32, i32
  }
  func.func @transform_4(%arg0: i32, %arg1: i32) -> (i32, i32, i32, i32) {
    %c0_i32 = arith.constant 0 : i32
    %c0_i32_0 = arith.constant 0 : i32
    %c0_i32_1 = arith.constant 0 : i32
    return %arg0, %arg1, %c0_i32, %c0_i32_0 : i32, i32, i32, i32
  }
}

</mosaic_0001>

<llo_original>
// kernel: tpu_custom_call.1
$region0: #{tpu_custom_call.1}
  #allocation0 [shape = 'u32[]', space=smem, size = 0x4, offset = 0x4, fixed_abs, tag = 'smem constant byte address 0x4 - core index']
  #allocation1 [shape = 'u32[72,128]{1,0:T(1,128)}', space=vmem, size = 0x9000, scoped, tag = 'internal scratch']
  %s0 = inlined_call_operand.vmem [shape: f32[2,1,128], index: 0, kind: input, shape index: {}]
  %s1 = inlined_call_operand.vmem [shape: f32[2,1,128], index: 1, kind: input, shape index: {}]
  %s2 = inlined_call_operand.vmem [shape: f32[128,128], index: 2, kind: input, shape index: {}]
  %s3 = inlined_call_operand.vmem [shape: f32[128,8], index: 3, kind: input, shape index: {}]
  %s4 = inlined_call_operand.vmem [shape: f32[2,1,1,1], index: 4, kind: output, shape index: {}]
  %s5 = sld [smem:[#allocation0]]
  $region49: #{tpu_custom_call.1} parent=0
    _
  %s7 = ssub.s32 1, %s5
  %s8 = scalar_select 0, %s7, %s5
  loop: start=0, step=1, limit=4
  $region2: #{tpu_custom_call.1} parent=0 // loop_pre_header
    _
  $region3: #{tpu_custom_call.1} parent=0 // loop_header
    %s10 = sphi 0, %s14
    %p11 = scmp.ge.s32.totalorder %s10, 4
    %s17 = sphi 0, %s29
    %s18 = sphi 0, %s25
    %s19 = sphi 0, %s17
    %s20 = sphi 0, %s18
    %s21 = sphi 0, %s19
    %s22 = sphi 0, %s20
    %s34 = sphi 0, %s36
    %s37 = sphi 0, %s34
    %s38 = sphi 0, %s37
    %s54 = sphi 0, %s38
    %s60 = sphi 0, %s62
    %s63 = sphi 0, %s60
    %s64 = sphi 0, %s63
    %s80 = sphi 0, %s64
    %s84 = sphi 0, %s84
    %s86 = sphi 0, %s84
    %s87 = sphi 0, %s86
    %s101 = sphi 0, %s87
    %s105 = sphi 0, %s105
    %s107 = sphi 0, %s105
    %s108 = sphi 0, %s107
    %s122 = sphi 0, %s108
    %s130 = sphi 0, %s132
    %s133 = sphi 0, %s130
    %s134 = sphi 0, %s133
    %s150 = sphi 0, %s134
  $region4: #{tpu_custom_call.1} parent=0 // loop_header_branch
    %13 = sbr.rel (%p11) target = $region8
  $region5: #{tpu_custom_call.1} parent=0 // loop_body
    %s15 = ssub.s32 %s10, 1
    %s16 = ssub.s32 %s10, 2
    %s23 = sadd.s32 1, %s18
    %p24 = scmp.ge.s32.totalorder %s23, 1
    %s25 = scalar_select %p24, 0, %s23
    %s26 = sadd.s32 1, %s17
    %s27 = scalar_select %p24, %s26, %s17
    %p28 = scmp.ge.s32.totalorder %s27, 2
    %s29 = scalar_select %p28, 0, %s27
    %s30 = ssub.s32 %s17, %s29
    %s31 = ssub.s32 %s18, %s25
    %s32 = sor.u32 %s30, %s31
    %p33 = scmp.eq.s32.totalorder %s32, 0
    %s35 = sadd.s32 %s34, 1
    %s36 = scalar_select %p33, %s34, %s35
    %p39 = pneg %p33
    %p40 = scmp.eq.s32.totalorder %s10, 1
    %p41 = por %p39, %p40
    %p42 = scmp.ne.s32.totalorder %s34, %s37
    %p43 = scmp.eq.s32.totalorder %s10, 0
    %p44 = por %p42, %p43
    %p45 = scmp.ne.s32.totalorder %s34, %s37
    %p46 = scmp.eq.s32.totalorder %s15, 1
    %p47 = por %p45, %p46
    %p48 = scmp.ne.s32.totalorder %s37, %s38
    %p49 = scmp.eq.s32.totalorder %s15, 0
    %p50 = por %p48, %p49
    %p51 = scmp.ne.s32.totalorder %s37, %s38
    %p52 = scmp.eq.s32.totalorder %s16, 1
    %p53 = por %p51, %p52
    %p55 = scmp.ne.s32.totalorder %s38, %s54
    %p56 = scmp.eq.s32.totalorder %s16, 0
    %p57 = por %p55, %p56
    %s58 = ssub.s32 %s17, %s29
    %p59 = scmp.eq.s32.totalorder %s58, 0
    %s61 = sadd.s32 %s60, 1
    %s62 = scalar_select %p59, %s60, %s61
    %p65 = pneg %p59
    %p66 = scmp.eq.s32.totalorder %s10, 1
    %p67 = por %p65, %p66
    %p68 = scmp.ne.s32.totalorder %s60, %s63
    %p69 = scmp.eq.s32.totalorder %s10, 0
    %p70 = por %p68, %p69
    %p71 = scmp.ne.s32.totalorder %s60, %s63
    %p72 = scmp.eq.s32.totalorder %s15, 1
    %p73 = por %p71, %p72
    %p74 = scmp.ne.s32.totalorder %s63, %s64
    %p75 = scmp.eq.s32.totalorder %s15, 0
    %p76 = por %p74, %p75
    %p77 = scmp.ne.s32.totalorder %s63, %s64
    %p78 = scmp.eq.s32.totalorder %s16, 1
    %p79 = por %p77, %p78
    %p81 = scmp.ne.s32.totalorder %s64, %s80
    %p82 = scmp.eq.s32.totalorder %s16, 0
    %p83 = por %p81, %p82
    %s85 = sadd.s32 %s84, 1
    %p88 = scmp.eq.s32.totalorder %s10, 1
    %p89 = scmp.ne.s32.totalorder %s84, %s86
    %p90 = scmp.eq.s32.totalorder %s10, 0
    %p91 = por %p89, %p90
    %p92 = scmp.ne.s32.totalorder %s84, %s86
    %p93 = scmp.eq.s32.totalorder %s15, 1
    %p94 = por %p92, %p93
    %p95 = scmp.ne.s32.totalorder %s86, %s87
    %p96 = scmp.eq.s32.totalorder %s15, 0
    %p97 = por %p95, %p96
    %p98 = scmp.ne.s32.totalorder %s86, %s87
    %p99 = scmp.eq.s32.totalorder %s16, 1
    %p100 = por %p98, %p99
    %p102 = scmp.ne.s32.totalorder %s87, %s101
    %p103 = scmp.eq.s32.totalorder %s16, 0
    %p104 = por %p102, %p103
    %s106 = sadd.s32 %s105, 1
    %p109 = scmp.eq.s32.totalorder %s10, 1
    %p110 = scmp.ne.s32.totalorder %s105, %s107
    %p111 = scmp.eq.s32.totalorder %s10, 0
    %p112 = por %p110, %p111
    %p113 = scmp.ne.s32.totalorder %s105, %s107
    %p114 = scmp.eq.s32.totalorder %s15, 1
    %p115 = por %p113, %p114
    %p116 = scmp.ne.s32.totalorder %s107, %s108
    %p117 = scmp.eq.s32.totalorder %s15, 0
    %p118 = por %p116, %p117
    %p119 = scmp.ne.s32.totalorder %s107, %s108
    %p120 = scmp.eq.s32.totalorder %s16, 1
    %p121 = por %p119, %p120
    %p123 = scmp.ne.s32.totalorder %s108, %s122
    %p124 = scmp.eq.s32.totalorder %s16, 0
    %p125 = por %p123, %p124
    %s126 = ssub.s32 %s17, %s29
    %s127 = ssub.s32 %s18, %s25
    %s128 = sor.u32 %s126, %s127
    %p129 = scmp.eq.s32.totalorder %s128, 0
    %s131 = sadd.s32 %s130, 1
    %s132 = scalar_select %p129, %s130, %s131
    %p135 = pneg %p129
    %p136 = scmp.eq.s32.totalorder %s10, 1
    %p137 = por %p135, %p136
    %p138 = scmp.ne.s32.totalorder %s130, %s133
    %p139 = scmp.eq.s32.totalorder %s10, 0
    %p140 = por %p138, %p139
    %p141 = scmp.ne.s32.totalorder %s130, %s133
    %p142 = scmp.eq.s32.totalorder %s15, 1
    %p143 = por %p141, %p142
    %p144 = scmp.ne.s32.totalorder %s133, %s134
    %p145 = scmp.eq.s32.totalorder %s15, 0
    %p146 = por %p144, %p145
    %p147 = scmp.ne.s32.totalorder %s133, %s134
    %p148 = scmp.eq.s32.totalorder %s16, 1
    %p149 = por %p147, %p148
    %p151 = scmp.ne.s32.totalorder %s134, %s150
    %p152 = scmp.eq.s32.totalorder %s16, 0
    %p153 = por %p151, %p152
    %p154 = scmp.le.s32.totalorder 1, %s10
    %p155 = scmp.lt.s32.totalorder %s10, 3
    %p156 = pnand %p154, %p155
    %p157 = pneg %p156
    // Predicated region
    $region9: #{tpu_custom_call.1} parent=5 // pred_check
      _
    $region10: #{tpu_custom_call.1} parent=5 // pred_check_branch
      %159 = sbr.rel (%p156) target = $region12
    $region11: #{tpu_custom_call.1} parent=5 // pred_region
      %s160 = ssub.s32 %s10, 1
      // Predicated region
      $region13: #{tpu_custom_call.1} parent=11 // pred_check
        %p161 = pneg %p97
      $region14: #{tpu_custom_call.1} parent=11 // pred_check_branch
        %163 = sbr.rel (%p161) target = $region16
      $region15: #{tpu_custom_call.1} parent=11 // pred_region
        _
      $region16: #{tpu_custom_call.1} parent=11 // pred_fallthru
        _
      // Predicated region
      $region17: #{tpu_custom_call.1} parent=11 // pred_check
        %p164 = pneg %p118
      $region18: #{tpu_custom_call.1} parent=11 // pred_check_branch
        %166 = sbr.rel (%p164) target = $region20
      $region19: #{tpu_custom_call.1} parent=11 // pred_region
        _
      $region20: #{tpu_custom_call.1} parent=11 // pred_fallthru
        _
    $region12: #{tpu_custom_call.1} parent=5 // pred_fallthru
      _
    %p167 = scmp.lt.s32.totalorder %s10, 2
    // Predicated region
    $region21: #{tpu_custom_call.1} parent=5 // pred_check
      %p168 = pneg %p167
    $region22: #{tpu_custom_call.1} parent=5 // pred_check_branch
      %170 = sbr.rel (%p168) target = $region24
    $region23: #{tpu_custom_call.1} parent=5 // pred_region
      // Predicated region
      $region25: #{tpu_custom_call.1} parent=23 // pred_check
        %p171 = pneg %p44
      $region26: #{tpu_custom_call.1} parent=23 // pred_check_branch
        %173 = sbr.rel (%p171) target = $region28
      $region27: #{tpu_custom_call.1} parent=23 // pred_region
        %p174 = scmp.lt.s32.totalorder %s17, 1
        %s175 = scalar_select %p174, %s17, 1
        %p176 = scmp.lt.s32.totalorder %s18, 0
        %s177 = scalar_select %p176, %s18, 0
        %s178 = sadd.s32 %s177, %s175
        %s179 = scalar_lea.vmem %s0, %s178
      $region28: #{tpu_custom_call.1} parent=23 // pred_fallthru
        _
      // Predicated region
      $region29: #{tpu_custom_call.1} parent=23 // pred_check
        %p180 = pneg %p70
      $region30: #{tpu_custom_call.1} parent=23 // pred_check_branch
        %182 = sbr.rel (%p180) target = $region32
      $region31: #{tpu_custom_call.1} parent=23 // pred_region
        %p183 = scmp.lt.s32.totalorder %s17, 1
        %s184 = scalar_select %p183, %s17, 1
        %s185 = scalar_lea.vmem %s1, %s184
      $region32: #{tpu_custom_call.1} parent=23 // pred_fallthru
        _
    $region24: #{tpu_custom_call.1} parent=5 // pred_fallthru
      _
    %p186 = scmp.le.s32.totalorder 1, %s10
    %p187 = scmp.lt.s32.totalorder %s10, 3
    %p188 = pnand %p186, %p187
    %p189 = pneg %p188
    // Predicated region
    $region33: #{tpu_custom_call.1} parent=5 // pred_check
      _
    $region34: #{tpu_custom_call.1} parent=5 // pred_check_branch
      %191 = sbr.rel (%p188) target = $region36
    $region35: #{tpu_custom_call.1} parent=5 // pred_region
      %s192 = ssub.s32 %s10, 1
      %p193 = scmp.lt.s32.totalorder %s19, 1
      %s194 = scalar_select %p193, %s19, 1
      %p195 = scmp.lt.s32.totalorder %s20, 0
      %s196 = scalar_select %p195, %s20, 0
      %s197 = sadd.s32 %s196, %s194
      %s198 = scalar_lea.vmem %s0, %s197
      %p199 = pneg %p50
      %p200 = pneg %p47
      %p201 = scmp.lt.s32.totalorder %s19, 1
      %s202 = scalar_select %p201, %s19, 1
      %s203 = scalar_lea.vmem %s1, %s202
      %p204 = pneg %p76
      %p205 = pneg %p73
      %p206 = pneg %p97
      %p207 = pneg %p94
      %p208 = pneg %p118
      %p209 = pneg %p115
      %p210 = pneg %p146
      %p211 = pneg %p143
      %p212 = scmp.lt.s32.totalorder %s19, 1
      %s213 = scalar_select %p212, %s19, 1
      %p214 = scmp.lt.s32.totalorder %s20, 0
      %s215 = scalar_select %p214, %s20, 0
      %s216 = sadd.s32 %s215, %s213
      %s217 = scalar_lea.vmem %s4, %s216
      %p218 = scmp.lt.s32.totalorder %s19, 1
      %s219 = scalar_select %p218, %s19, 1
      %p220 = scmp.lt.s32.totalorder %s20, 0
      %s221 = scalar_select %p220, %s20, 0
      %s222 = sadd.s32 %s221, %s219
      %s223 = scalar_lea.vmem %s0, %s222
      %p224 = scmp.lt.s32.totalorder %s19, 1
      %s225 = scalar_select %p224, %s19, 1
      %s226 = scalar_lea.vmem %s1, %s225
      %p227 = scmp.lt.s32.totalorder %s19, 1
      %s228 = scalar_select %p227, %s19, 1
      %p229 = scmp.lt.s32.totalorder %s20, 0
      %s230 = scalar_select %p229, %s20, 0
      %s231 = sadd.s32 %s230, %s228
      %s232 = scalar_lea.vmem %s4, %s231
      %v233 = vld [vmem:[%s223] sm:$0x1]
      %v234 = vld [vmem:[%s2] sm:$0xff]
      %v235 = vld [vmem:[%s2 + $0x8] sm:$0xff]
      %v236 = vld [vmem:[%s2 + $0x10] sm:$0xff]
      %v237 = vld [vmem:[%s2 + $0x18] sm:$0xff]
      %v238 = vld [vmem:[%s2 + $0x20] sm:$0xff]
      %v239 = vld [vmem:[%s2 + $0x28] sm:$0xff]
      %v240 = vld [vmem:[%s2 + $0x30] sm:$0xff]
      %v241 = vld [vmem:[%s2 + $0x38] sm:$0xff]
      %v242 = vld [vmem:[%s2 + $0x40] sm:$0xff]
      %v243 = vld [vmem:[%s2 + $0x48] sm:$0xff]
      %v244 = vld [vmem:[%s2 + $0x50] sm:$0xff]
      %v245 = vld [vmem:[%s2 + $0x58] sm:$0xff]
      %v246 = vld [vmem:[%s2 + $0x60] sm:$0xff]
      %v247 = vld [vmem:[%s2 + $0x68] sm:$0xff]
      %v248 = vld [vmem:[%s2 + $0x70] sm:$0xff]
      %v249 = vld [vmem:[%s2 + $0x78] sm:$0xff]
      %250 = vmatpush.msra.mxu0 %v249
      %251 = vmatpush.msra.mxu0 %v248
      %252 = vmatpush.msra.mxu0 %v247
      %253 = vmatpush.msra.mxu0 %v246
      %254 = vmatpush.msra.mxu0 %v245
      %255 = vmatpush.msra.mxu0 %v244
      %256 = vmatpush.msra.mxu0 %v243
      %257 = vmatpush.msra.mxu0 %v242
      %258 = vmatpush.msra.mxu0 %v241
      %259 = vmatpush.msra.mxu0 %v240
      %260 = vmatpush.msra.mxu0 %v239
      %261 = vmatpush.msra.mxu0 %v238
      %262 = vmatpush.msra.mxu0 %v237
      %263 = vmatpush.msra.mxu0 %v236
      %264 = vmatpush.msra.mxu0 %v235
      %265 = vmatpush.msra.mxu0 %v234
      %266 = vmatmul.f32.gmra.mxu0 %v233
      %v267 = vpop.f32.mrf.mxu0
      %v268 = vadd.f32 0.0, %v267
      %269 = vdwg.mxu0
      %v270 = vld [vmem:[%s226] sm:$0x1]
      %v271 = vsub.f32 %v268, %v270
      %v272 = vmul.f32 %v271, %v271
      %v273 = vld [vmem:[%s3] sm:$0xff]
      %v274 = vld [vmem:[%s3 + $0x8] sm:$0xff]
      %v275 = vld [vmem:[%s3 + $0x10] sm:$0xff]
      %v276 = vld [vmem:[%s3 + $0x18] sm:$0xff]
      %v277 = vld [vmem:[%s3 + $0x20] sm:$0xff]
      %v278 = vld [vmem:[%s3 + $0x28] sm:$0xff]
      %v279 = vld [vmem:[%s3 + $0x30] sm:$0xff]
      %v280 = vld [vmem:[%s3 + $0x38] sm:$0xff]
      %v281 = vld [vmem:[%s3 + $0x40] sm:$0xff]
      %v282 = vld [vmem:[%s3 + $0x48] sm:$0xff]
      %v283 = vld [vmem:[%s3 + $0x50] sm:$0xff]
      %v284 = vld [vmem:[%s3 + $0x58] sm:$0xff]
      %v285 = vld [vmem:[%s3 + $0x60] sm:$0xff]
      %v286 = vld [vmem:[%s3 + $0x68] sm:$0xff]
      %v287 = vld [vmem:[%s3 + $0x70] sm:$0xff]
      %v288 = vld [vmem:[%s3 + $0x78] sm:$0xff]
      %289 = vmatpush.msra.mxu0 %v288
      %290 = vmatpush.msra.mxu0 %v287
      %291 = vmatpush.msra.mxu0 %v286
      %292 = vmatpush.msra.mxu0 %v285
      %293 = vmatpush.msra.mxu0 %v284
      %294 = vmatpush.msra.mxu0 %v283
      %295 = vmatpush.msra.mxu0 %v282
      %296 = vmatpush.msra.mxu0 %v281
      %297 = vmatpush.msra.mxu0 %v280
      %298 = vmatpush.msra.mxu0 %v279
      %299 = vmatpush.msra.mxu0 %v278
      %300 = vmatpush.msra.mxu0 %v277
      %301 = vmatpush.msra.mxu0 %v276
      %302 = vmatpush.msra.mxu0 %v275
      %303 = vmatpush.msra.mxu0 %v274
      %304 = vmatpush.msra.mxu0 %v273
      %305 = vmatmul.f32.gmra.mxu0 %v272
      %v306 = vpop.f32.mrf.mxu0
      %v307 = vadd.f32 0.0, %v306
      %308 = vdwg.mxu0
      %309 = vxpose.xlu0.b32.start [1/16] %v307, 128
      %310 = vxpose.xlu0.b32.cont [2/16] 0.0, 128
      %311 = vxpose.xlu0.b32.cont [3/16] 0.0, 128
      %312 = vxpose.xlu0.b32.cont [4/16] 0.0, 128
      %313 = vxpose.xlu0.b32.cont [5/16] 0.0, 128
      %314 = vxpose.xlu0.b32.cont [6/16] 0.0, 128
      %315 = vxpose.xlu0.b32.cont [7/16] 0.0, 128
      %316 = vxpose.xlu0.b32.cont [8/16] 0.0, 128
      %317 = vxpose.xlu0.b32.cont [9/16] 0.0, 128
      %318 = vxpose.xlu0.b32.cont [10/16] 0.0, 128
      %319 = vxpose.xlu0.b32.cont [11/16] 0.0, 128
      %320 = vxpose.xlu0.b32.cont [12/16] 0.0, 128
      %321 = vxpose.xlu0.b32.cont [13/16] 0.0, 128
      %322 = vxpose.xlu0.b32.cont [14/16] 0.0, 128
      %323 = vxpose.xlu0.b32.cont [15/16] 0.0, 128
      %324 = vxpose.xlu0.b32.end [16/16] 0.0, 128
      %v325 = vpop.trf.xlu0
      %v326 = vpop.trf.xlu0
      %v327 = vpop.trf.xlu0
      %v328 = vpop.trf.xlu0
      %v329 = vpop.trf.xlu0
      %v330 = vpop.trf.xlu0
      %v331 = vpop.trf.xlu0
      %v332 = vpop.trf.xlu0
      %v333 = vpop.trf.xlu0
      %v334 = vpop.trf.xlu0
      %v335 = vpop.trf.xlu0
      %v336 = vpop.trf.xlu0
      %v337 = vpop.trf.xlu0
      %v338 = vpop.trf.xlu0
      %v339 = vpop.trf.xlu0
      %v340 = vpop.trf.xlu0
      %v341 = vrsqrt.pop %v325
      %v342 = vmul.f32 %v341, %v325
      %v343 = vmul.f32 %v342, %v341
      %v344 = vmul.f32 0.5, %v343
      %v345 = vsub.f32 1.5, %v344
      %v346 = vmul.f32 %v341, %v345
      %v347 = vmul.f32 %v325, %v346
      %vm348 = vcmp.eq.f32.partialorder %v325, inf
      %v349 = vsel %vm348, %v325, %v347
      %vm350 = vcmp.eq.f32.partialorder %v325, 0.0
      %v351 = vand.u32 %v325, 2147483648
      %v352 = vsel %vm350, %v351, %v349
      %v353 = vmul.f32 %v352, 1.2
      %v354 = vsub.f32 1.0, %v353
      %v355 = vmax.f32 %v354, 1e-06
      %v356 = vpow.f32 %v355, 0.7
      %v357 = vsub.f32 1.0, %v356
      %v358 = vmul.f32 %v352, %v357
      %vm359 = vcmask 7168
      %v360 = vsel %vm359, %v358, 0.0
      %361 = vadd.xlane.f32.xlu0 %v360
      %v362 = vpop.xlane.xlu0 %361
      %v363 = vrot.slane %v362, 4
      %v364 = vadd.f32 %v362, %v363
      %v365 = vrot.slane %v364, 2
      %v366 = vadd.f32 %v364, %v365
      %v367 = vrot.slane %v366, 1
      %v368 = vadd.f32 %v366, %v367
      %s369 = vtos %v368
      %v370 = vstv %s369
      %vm371 = vcmask 0
      %372 = vst.msk [vmem:[%s232] sm:$0x1] %vm371, %v370
      %p373 = scmp.lt.s32.totalorder %s19, 1
      %s374 = scalar_select %p373, %s19, 1
      %p375 = scmp.lt.s32.totalorder %s20, 0
      %s376 = scalar_select %p375, %s20, 0
      %s377 = sadd.s32 %s376, %s374
      %s378 = scalar_lea.vmem %s4, %s377
      // Predicated region
      $region37: #{tpu_custom_call.1} parent=35 // pred_check
        %p379 = pneg %p143
      $region38: #{tpu_custom_call.1} parent=35 // pred_check_branch
        %381 = sbr.rel (%p379) target = $region40
      $region39: #{tpu_custom_call.1} parent=35 // pred_region
        _
      $region40: #{tpu_custom_call.1} parent=35 // pred_fallthru
        _
    $region36: #{tpu_custom_call.1} parent=5 // pred_fallthru
      _
    %p382 = scmp.le.s32.totalorder 2, %s10
    // Predicated region
    $region41: #{tpu_custom_call.1} parent=5 // pred_check
      %p383 = pneg %p382
    $region42: #{tpu_custom_call.1} parent=5 // pred_check_branch
      %385 = sbr.rel (%p383) target = $region44
    $region43: #{tpu_custom_call.1} parent=5 // pred_region
      %s386 = ssub.s32 %s10, 2
      // Predicated region
      $region45: #{tpu_custom_call.1} parent=43 // pred_check
        %p387 = pneg %p149
      $region46: #{tpu_custom_call.1} parent=43 // pred_check_branch
        %389 = sbr.rel (%p387) target = $region48
      $region47: #{tpu_custom_call.1} parent=43 // pred_region
        %p390 = scmp.lt.s32.totalorder %s21, 1
        %s391 = scalar_select %p390, %s21, 1
        %p392 = scmp.lt.s32.totalorder %s22, 0
        %s393 = scalar_select %p392, %s22, 0
        %s394 = sadd.s32 %s393, %s391
        %s395 = scalar_lea.vmem %s4, %s394
      $region48: #{tpu_custom_call.1} parent=43 // pred_fallthru
        _
    $region44: #{tpu_custom_call.1} parent=5 // pred_fallthru
      _
  $region6: #{tpu_custom_call.1} parent=0 // loop_footer
    %s14 = sadd.s32 1, %s10
  $region7: #{tpu_custom_call.1} parent=0 // loop_footer_branch
    %9 = sbr.rel target = $region3
  $region8: #{tpu_custom_call.1} parent=0 // loop_exit
    _

</llo_original>
